<compile_context>
chip_gen: v5e
topology: v5e:2x2
jax: 0.10.0
libtpu: 0.0.40
codegen_flags: <defaults>
</compile_context>

<pallas_src>
import jax
import jax.numpy as jnp
from jax.experimental import pallas as pl
from jax.experimental.pallas import tpu as pltpu

# ---------------- config (mirrors the torch config dict) ----------------
B, K, L = 2, 8, 16                 # batch, features (target_dim), sequence length
EMB_TIME = 32                      # config['model']['timeemb']
EMB_FEAT = 16                      # config['model']['featureemb']
IS_UNCOND = False                  # conditional model
SIDE_DIM = EMB_TIME + EMB_FEAT + (0 if IS_UNCOND else 1)   # 49
INPUT_DIM = 1 if IS_UNCOND else 2                          # 2
NUM_STEPS = 10
SIGMA_BEGIN, SIGMA_END = 1.0, 0.01
ANNEAL_POWER = 2.0
USE_SIGMA_SCALE = True             # config['diffusion']['sigma_scale']
SIGMA_SCALE_MAX = 3.0              # config['diffusion']['non_homo_sigma_max_scale']
NOISE_TYPE = 'gaussian'
# num_sample_features >= target_dim, so sample_features() is not triggered on this path.

STEP_EMB = 16                      # diffusion-step embedding width of the stand-in score net
HIDDEN = 128                       # hidden width of the stand-in score net
C_IN = INPUT_DIM + SIDE_DIM + STEP_EMB   # 67 channels: [cond_obs, noisy_target, side, step]
C_PAD = 128                        # contraction dim padded to a full lane width
KL = K * L                         # 128 (lane-dense)

_VMEM = pltpu.MemorySpace.VMEM
_SMEM = pltpu.MemorySpace.SMEM


# ---------------- fused kernel: prep -> stand-in diffmodel -> loss ----------------
# TODO(synk): diff_CSDI's definition is not provided; a deterministic fused 2-layer MLP
#             stand-in keeps the same call interface (diff input + side_info + step labels).
def _fused_kernel(sig_ref,                      # SMEM (B,)  : used_sigmas
                  obs_ref, noise_ref, normed_ref, cond_ref, omask_ref,   # VMEM (B, KL)
                  xstat_ref,                    # VMEM (B, C_PAD, KL) static channels
                  w1t_ref,                      # VMEM (H, C_PAD)
                  w1nt_ref,                     # VMEM (H, 1)   w1 row for noisy-target channel
                  b1t_ref,                      # VMEM (H, 1)
                  w2t_ref,                      # VMEM (1, H)   score read-out column
                  loss_ref, neval_ref):         # SMEM (1, 1) each
    obs = obs_ref[...]
    noise = noise_ref[...]
    normed = normed_ref[...]
    cond = cond_ref[...]
    omask = omask_ref[...]

    # per-sample sigma from SMEM scalars, broadcast over the fused (K*L) lane axis
    bidx = jax.lax.broadcasted_iota(jnp.int32, (B, KL), 0)
    sig = jnp.full((B, KL), sig_ref[0], dtype=jnp.float32)
    for b in range(1, B):
        sig = jnp.where(bidx == b, sig_ref[b], sig)

    # calc_sigma_scale: 2*(max-1)/(1+exp(-x/5)) + 2 - max   (exp -> EUP, f32 throughout)
    if USE_SIGMA_SCALE:
        scale = (2.0 * (SIGMA_SCALE_MAX - 1.0) / (1.0 + jnp.exp(-0.2 * normed))
                 + (2.0 - SIGMA_SCALE_MAX))
    else:
        scale = jnp.ones_like(normed)

    noisy = obs + noise * sig * scale                      # noisy_data (B, KL)
    # gaussian noise_type: total_sigma = used_sigmas; target = -(noisy - obs)/sigma^2
    target = -(noisy - obs) / (sig * sig)

    # ---- stand-in diffmodel, channels-x-positions form: h_b = w1^T @ x_b  ----
    # x_b's static channels (cond_obs, side_info, step_emb, zero-padding) come from
    # xstat; the noisy-target channel is added as a rank-1 update so the in-kernel
    # noisy data never needs a layout change.
    noisy_target = (1.0 - cond) * noisy                    # (B, KL)
    w1t = w1t_ref[...]                                     # (H, C_PAD)
    w1nt = w1nt_ref[...]                                   # (H, 1)
    b1t = b1t_ref[...]                                     # (H, 1)
    w2t = w2t_ref[...]                                     # (1, H)
    rows = []
    for b in range(B):                                     # B=2, unrolled at trace time
        h = (jnp.dot(w1t, xstat_ref[b], preferred_element_type=jnp.float32)
             + w1nt * noisy_target[b:b + 1, :]             # rank-1: noisy-target channel
             + b1t)
        h = jnp.maximum(h, 0.0)                            # (H, KL)
        rows.append(jnp.dot(w2t, h, preferred_element_type=jnp.float32))   # (1, KL)
    score = jnp.concatenate(rows, axis=0)                  # predicted_score (B, KL)

    # ---- score-matching loss (full reduction to SMEM scalars) ----
    tmask = omask - cond                                   # target_mask
    diff = (score - target) * tmask
    sig_pow = sig * sig if ANNEAL_POWER == 2.0 else jnp.power(sig, ANNEAL_POWER)
    loss_all = 0.5 * diff * diff * sig_pow
    loss_ref[0, 0] = jnp.sum(loss_all)
    neval_ref[0, 0] = jnp.sum(tmask)


def fused_loss_pallas(used_sigmas, obs2d, noise2d, normed2d, cond2d, omask2d,
                      xstat, w1t, w1nt, b1t, w2t):
    vm = pl.BlockSpec(memory_space=_VMEM)
    return pl.pallas_call(
        _fused_kernel,
        out_shape=(jax.ShapeDtypeStruct((1, 1), jnp.float32),
                   jax.ShapeDtypeStruct((1, 1), jnp.float32)),
        in_specs=[pl.BlockSpec(memory_space=_SMEM)] + [vm] * 10,
        out_specs=(pl.BlockSpec(memory_space=_SMEM),
                   pl.BlockSpec(memory_space=_SMEM)),
    )(used_sigmas, obs2d, noise2d, normed2d, cond2d, omask2d,
      xstat, w1t, w1nt, b1t, w2t)


# ---------------- plain-JAX glue (embeddings / broadcast / layout) ----------------
def time_embedding(pos, d_model):
    # pos: (B, L) -> (B, L, d_model) with interleaved sin/cos
    position = pos[:, :, None]
    div_term = 1.0 / jnp.power(
        10000.0, jnp.arange(0, d_model, 2, dtype=jnp.float32) / d_model)
    pe = jnp.zeros((pos.shape[0], pos.shape[1], d_model), jnp.float32)
    pe = pe.at[:, :, 0::2].set(jnp.sin(position * div_term))
    pe = pe.at[:, :, 1::2].set(jnp.cos(position * div_term))
    return pe


def get_side_info(observed_tp, cond_mask, embed_weight):
    # cond_mask: (B, K, L) -> side_info (B, SIDE_DIM, K, L)
    time_embed = time_embedding(observed_tp, EMB_TIME)                       # (B, L, Et)
    time_embed = jnp.broadcast_to(time_embed[:, :, None, :], (B, L, K, EMB_TIME))
    feature_embed = jnp.broadcast_to(embed_weight[None, None], (B, L, K, EMB_FEAT))
    side_info = jnp.concatenate([time_embed, feature_embed], axis=-1)        # (B, L, K, Et+Ef)
    side_info = jnp.transpose(side_info, (0, 3, 2, 1))                       # (B, Et+Ef, K, L)
    side_mask = cond_mask[:, None]                                           # (B, 1, K, L)
    return jnp.concatenate([side_info, side_mask], axis=1)                   # (B, SIDE_DIM, K, L)


@jax.jit
def forward(batch, params, rng):
    # --- process_data (normalize_method == 'normalize' -> no reflect flipping) ---
    observed_data = jnp.transpose(batch['observed_data'], (0, 2, 1)).astype(jnp.float32)
    observed_mask = jnp.transpose(batch['observed_mask'], (0, 2, 1)).astype(jnp.float32)
    gt_mask = jnp.transpose(batch['gt_mask'], (0, 2, 1)).astype(jnp.float32)
    observed_tp = batch['timepoints'].astype(jnp.float32)                    # (B, L)

    # is_train == 1 and target_dim_base <= num_sample_features -> no feature sampling
    cond_mask = observed_mask * gt_mask                                      # get_test_pattern_mask
    side_info = get_side_info(observed_tp, cond_mask, params['embed'])       # (B, SIDE_DIM, K, L)

    # --- calc_loss (is_train == 1) ---
    k_lab, k_noise = jax.random.split(rng)
    sigmas = jnp.exp(jnp.linspace(jnp.log(SIGMA_BEGIN), jnp.log(SIGMA_END),
                                  NUM_STEPS)).astype(jnp.float32)
    labels = jax.random.randint(k_lab, (B,), 0, NUM_STEPS)
    used_sigmas = sigmas[labels]                                             # (B,)
    noise = jax.random.normal(k_noise, observed_data.shape, jnp.float32)

    # normalized_observed_data (torch.std is unbiased); no epsilon, faithful to reference
    mean0 = jnp.mean(observed_data, axis=0)
    std0 = jnp.std(observed_data, axis=0, ddof=1)
    normed = jnp.abs(observed_data - mean0) / std0                           # (B, K, L)

    # static per-position channel slab for the stand-in score net (channels x positions):
    #   ch 0          : cond_obs = cond_mask * observed_data
    #   ch 1          : 0 (noisy_target channel, filled in-kernel via rank-1 update)
    #   ch 2..50      : side_info (49)
    #   ch 51..66     : diffusion-step embedding (16), per sample
    #   ch 67..127    : zero padding (dense 128-wide MXU contraction)
    cond_obs = (cond_mask * observed_data).reshape(B, 1, KL)
    zeros_nt = jnp.zeros((B, 1, KL), jnp.float32)
    side_pos = side_info.reshape(B, SIDE_DIM, KL)
    step_emb = params['step_emb'][labels]                                    # (B, STEP_EMB)
    step_pos = jnp.broadcast_to(step_emb[:, :, None], (B, STEP_EMB, KL))
    xstat = jnp.concatenate([cond_obs, zeros_nt, side_pos, step_pos], axis=1)
    xstat = jnp.pad(xstat, ((0, 0), (0, C_PAD - C_IN), (0, 0)))              # (B, C_PAD, KL)

    w1t = jnp.pad(params['w1'], ((0, C_PAD - C_IN), (0, 0))).T               # (H, C_PAD)
    w1nt = params['w1'][1:2, :].T                                            # (H, 1)
    b1t = params['b1'].T                                                     # (H, 1)
    w2t = params['w2'].T                                                     # (1, H)

    loss_sum, num_eval = fused_loss_pallas(
        used_sigmas,
        observed_data.reshape(B, KL),
        noise.reshape(B, KL),
        normed.reshape(B, KL),
        cond_mask.reshape(B, KL),
        observed_mask.reshape(B, KL),
        xstat, w1t, w1nt, b1t, w2t)

    denom = jnp.where(num_eval[0, 0] > 0, num_eval[0, 0], 1.0)
    return loss_sum[0, 0] / denom


if __name__ == "__main__":
    key = jax.random.PRNGKey(0)
    kd, km, kg, kp, kfwd = jax.random.split(key, 5)

    # deterministic parameters (shapes implied by the module's __init__ + stand-in net)
    k1, k2, k3, k4 = jax.random.split(kp, 4)
    params = {
        'embed': jax.random.normal(k1, (K, EMB_FEAT), jnp.float32),          # nn.Embedding(K, Ef)
        'step_emb': jax.random.normal(k2, (NUM_STEPS, STEP_EMB), jnp.float32),
        'w1': jax.random.normal(k3, (C_IN, HIDDEN), jnp.float32) / jnp.sqrt(float(C_IN)),
        'b1': jnp.zeros((1, HIDDEN), jnp.float32),
        'w2': jax.random.normal(k4, (HIDDEN, 1), jnp.float32) / jnp.sqrt(float(HIDDEN)),
    }

    # deterministic example batch (PyTorch batch layout: (B, L, K))
    observed_data = jax.random.normal(kd, (B, L, K), jnp.float32)
    observed_mask = (jax.random.uniform(km, (B, L, K)) > 0.2).astype(jnp.float32)
    gt_mask = observed_mask * (jax.random.uniform(kg, (B, L, K)) > 0.5).astype(jnp.float32)
    timepoints = jnp.broadcast_to(jnp.arange(L, dtype=jnp.float32)[None, :], (B, L))

    batch = {'observed_data': observed_data, 'observed_mask': observed_mask,
             'gt_mask': gt_mask, 'timepoints': timepoints}

    loss = forward(batch, params, kfwd)
    jax.block_until_ready(loss)
    assert jnp.isfinite(loss)
    print("KERNEL_OK")
</pallas_src>

<mosaic_0001>
module attributes {stable_mosaic.version = 11 : i64} {
  func.func @_fused_kernel(%arg0: memref<2xf32, #tpu.memory_space<smem>>, %arg1: memref<2x128xf32, #tpu.memory_space<vmem>>, %arg2: memref<2x128xf32, #tpu.memory_space<vmem>>, %arg3: memref<2x128xf32, #tpu.memory_space<vmem>>, %arg4: memref<2x128xf32, #tpu.memory_space<vmem>>, %arg5: memref<2x128xf32, #tpu.memory_space<vmem>>, %arg6: memref<2x128x128xf32, #tpu.memory_space<vmem>>, %arg7: memref<128x128xf32, #tpu.memory_space<vmem>>, %arg8: memref<128x1xf32, #tpu.memory_space<vmem>>, %arg9: memref<128x1xf32, #tpu.memory_space<vmem>>, %arg10: memref<1x128xf32, #tpu.memory_space<vmem>>, %arg11: memref<1x1xf32, #tpu.memory_space<smem>>, %arg12: memref<1x1xf32, #tpu.memory_space<smem>>) attributes {dimension_semantics = [], scalar_prefetch = 0 : i64, scratch_operands = 0 : i64, tpu.core_type = #tpu.core_type<tc>} {
    %c0 = arith.constant 0 : index
    %c0_0 = arith.constant 0 : index
    %0 = vector.load %arg1[%c0, %c0_0] : memref<2x128xf32, #tpu.memory_space<vmem>>, vector<2x128xf32>
    %c0_1 = arith.constant 0 : index
    %c0_2 = arith.constant 0 : index
    %1 = vector.load %arg2[%c0_1, %c0_2] : memref<2x128xf32, #tpu.memory_space<vmem>>, vector<2x128xf32>
    %c0_3 = arith.constant 0 : index
    %c0_4 = arith.constant 0 : index
    %2 = vector.load %arg3[%c0_3, %c0_4] : memref<2x128xf32, #tpu.memory_space<vmem>>, vector<2x128xf32>
    %c0_5 = arith.constant 0 : index
    %c0_6 = arith.constant 0 : index
    %3 = vector.load %arg4[%c0_5, %c0_6] : memref<2x128xf32, #tpu.memory_space<vmem>>, vector<2x128xf32>
    %c0_7 = arith.constant 0 : index
    %c0_8 = arith.constant 0 : index
    %4 = vector.load %arg5[%c0_7, %c0_8] : memref<2x128xf32, #tpu.memory_space<vmem>>, vector<2x128xf32>
    %5 = tpu.iota {dimensions = array<i32: 0>} : vector<2x128xi32>
    %c0_9 = arith.constant 0 : index
    %6 = memref.load %arg0[%c0_9] : memref<2xf32, #tpu.memory_space<smem>>
    %7 = vector.broadcast %6 : f32 to vector<2x128xf32>
    %c1_i32 = arith.constant 1 : i32
    %8 = vector.broadcast %c1_i32 : i32 to vector<2x128xi32>
    %9 = arith.cmpi eq, %5, %8 : vector<2x128xi32>
    %c1 = arith.constant 1 : index
    %10 = memref.load %arg0[%c1] : memref<2xf32, #tpu.memory_space<smem>>
    %11 = vector.broadcast %10 : f32 to vector<2x128xf32>
    %12 = arith.select %9, %11, %7 : vector<2x128xi1>, vector<2x128xf32>
    %cst = arith.constant -2.000000e-01 : f32
    %13 = vector.broadcast %cst : f32 to vector<2x128xf32>
    %14 = arith.mulf %13, %2 : vector<2x128xf32>
    %15 = math.exp %14 : vector<2x128xf32>
    %cst_10 = arith.constant 1.000000e+00 : f32
    %16 = vector.broadcast %cst_10 : f32 to vector<2x128xf32>
    %17 = arith.addf %16, %15 : vector<2x128xf32>
    %cst_11 = arith.constant 4.000000e+00 : f32
    %18 = vector.broadcast %cst_11 : f32 to vector<2x128xf32>
    %19 = arith.divf %18, %17 : vector<2x128xf32>
    %cst_12 = arith.constant -1.000000e+00 : f32
    %20 = vector.broadcast %cst_12 : f32 to vector<2x128xf32>
    %21 = arith.addf %19, %20 : vector<2x128xf32>
    %22 = arith.mulf %1, %12 : vector<2x128xf32>
    %23 = arith.mulf %22, %21 : vector<2x128xf32>
    %24 = arith.addf %0, %23 : vector<2x128xf32>
    %25 = arith.subf %24, %0 : vector<2x128xf32>
    %cst_13 = arith.constant 0.000000e+00 : f32
    %26 = vector.broadcast %cst_13 : f32 to vector<2x128xf32>
    %27 = arith.subf %26, %25 : vector<2x128xf32>
    %28 = arith.mulf %12, %12 : vector<2x128xf32>
    %29 = arith.divf %27, %28 : vector<2x128xf32>
    %cst_14 = arith.constant 1.000000e+00 : f32
    %30 = vector.broadcast %cst_14 : f32 to vector<2x128xf32>
    %31 = arith.subf %30, %3 : vector<2x128xf32>
    %32 = arith.mulf %31, %24 : vector<2x128xf32>
    %c0_15 = arith.constant 0 : index
    %c0_16 = arith.constant 0 : index
    %33 = vector.load %arg7[%c0_15, %c0_16] : memref<128x128xf32, #tpu.memory_space<vmem>>, vector<128x128xf32>
    %c0_17 = arith.constant 0 : index
    %c0_18 = arith.constant 0 : index
    %34 = vector.load %arg8[%c0_17, %c0_18] : memref<128x1xf32, #tpu.memory_space<vmem>>, vector<128x1xf32>
    %c0_19 = arith.constant 0 : index
    %c0_20 = arith.constant 0 : index
    %35 = vector.load %arg9[%c0_19, %c0_20] : memref<128x1xf32, #tpu.memory_space<vmem>>, vector<128x1xf32>
    %c0_21 = arith.constant 0 : index
    %c0_22 = arith.constant 0 : index
    %36 = vector.load %arg10[%c0_21, %c0_22] : memref<1x128xf32, #tpu.memory_space<vmem>>, vector<1x128xf32>
    %c0_23 = arith.constant 0 : index
    %c0_24 = arith.constant 0 : index
    %c0_25 = arith.constant 0 : index
    %37 = vector.load %arg6[%c0_23, %c0_24, %c0_25] : memref<2x128x128xf32, #tpu.memory_space<vmem>>, vector<1x128x128xf32>
    %38 = vector.shape_cast %37 : vector<1x128x128xf32> to vector<128x128xf32>
    %cst_26 = arith.constant dense<0.000000e+00> : vector<128x128xf32>
    %39 = tpu.matmul %33, %38, %cst_26 {dimension_numbers = #tpu.dot_dimension_numbers<[1], [0], [0], [1], [0, 0, 1, 1], [], []>} : vector<128x128xf32>, vector<128x128xf32>, vector<128x128xf32> -> vector<128x128xf32>
    %40 = vector.extract_strided_slice %32 {offsets = [0, 0], sizes = [1, 128], strides = [1, 1]} : vector<2x128xf32> to vector<1x128xf32>
    %41 = vector.broadcast %34 : vector<128x1xf32> to vector<128x128xf32>
    %42 = vector.broadcast %40 : vector<1x128xf32> to vector<128x128xf32>
    %43 = arith.mulf %41, %42 : vector<128x128xf32>
    %44 = arith.addf %39, %43 : vector<128x128xf32>
    %45 = vector.broadcast %35 : vector<128x1xf32> to vector<128x128xf32>
    %46 = arith.addf %44, %45 : vector<128x128xf32>
    %cst_27 = arith.constant 0.000000e+00 : f32
    %47 = vector.broadcast %cst_27 : f32 to vector<128x128xf32>
    %48 = arith.maximumf %46, %47 : vector<128x128xf32>
    %cst_28 = arith.constant dense<0.000000e+00> : vector<1x128xf32>
    %49 = tpu.matmul %36, %48, %cst_28 {dimension_numbers = #tpu.dot_dimension_numbers<[1], [0], [0], [1], [0, 0, 1, 1], [], []>} : vector<1x128xf32>, vector<128x128xf32>, vector<1x128xf32> -> vector<1x128xf32>
    %c1_29 = arith.constant 1 : index
    %c0_30 = arith.constant 0 : index
    %c0_31 = arith.constant 0 : index
    %50 = vector.load %arg6[%c1_29, %c0_30, %c0_31] : memref<2x128x128xf32, #tpu.memory_space<vmem>>, vector<1x128x128xf32>
    %51 = vector.shape_cast %50 : vector<1x128x128xf32> to vector<128x128xf32>
    %cst_32 = arith.constant dense<0.000000e+00> : vector<128x128xf32>
    %52 = tpu.matmul %33, %51, %cst_32 {dimension_numbers = #tpu.dot_dimension_numbers<[1], [0], [0], [1], [0, 0, 1, 1], [], []>} : vector<128x128xf32>, vector<128x128xf32>, vector<128x128xf32> -> vector<128x128xf32>
    %53 = vector.extract_strided_slice %32 {offsets = [1, 0], sizes = [1, 128], strides = [1, 1]} : vector<2x128xf32> to vector<1x128xf32>
    %54 = vector.broadcast %34 : vector<128x1xf32> to vector<128x128xf32>
    %55 = vector.broadcast %53 : vector<1x128xf32> to vector<128x128xf32>
    %56 = arith.mulf %54, %55 : vector<128x128xf32>
    %57 = arith.addf %52, %56 : vector<128x128xf32>
    %58 = vector.broadcast %35 : vector<128x1xf32> to vector<128x128xf32>
    %59 = arith.addf %57, %58 : vector<128x128xf32>
    %cst_33 = arith.constant 0.000000e+00 : f32
    %60 = vector.broadcast %cst_33 : f32 to vector<128x128xf32>
    %61 = arith.maximumf %59, %60 : vector<128x128xf32>
    %cst_34 = arith.constant dense<0.000000e+00> : vector<1x128xf32>
    %62 = tpu.matmul %36, %61, %cst_34 {dimension_numbers = #tpu.dot_dimension_numbers<[1], [0], [0], [1], [0, 0, 1, 1], [], []>} : vector<1x128xf32>, vector<128x128xf32>, vector<1x128xf32> -> vector<1x128xf32>
    %63 = tpu.concatenate %49, %62 in 0 : vector<1x128xf32>, vector<1x128xf32> -> vector<2x128xf32>
    %64 = arith.subf %4, %3 : vector<2x128xf32>
    %65 = arith.subf %63, %29 : vector<2x128xf32>
    %66 = arith.mulf %65, %64 : vector<2x128xf32>
    %67 = arith.mulf %12, %12 : vector<2x128xf32>
    %cst_35 = arith.constant 5.000000e-01 : f32
    %68 = vector.broadcast %cst_35 : f32 to vector<2x128xf32>
    %69 = arith.mulf %68, %66 : vector<2x128xf32>
    %70 = arith.mulf %69, %66 : vector<2x128xf32>
    %71 = arith.mulf %70, %67 : vector<2x128xf32>
    %72 = vector.shape_cast %71 : vector<2x128xf32> to vector<1x2x128xf32>
    %cst_36 = arith.constant dense<0.000000e+00> : vector<1xf32>
    %73 = vector.multi_reduction <add>, %72, %cst_36 [1, 2] : vector<1x2x128xf32> to vector<1xf32>
    %74 = vector.shape_cast %73 : vector<1xf32> to vector<1x1x1xf32>
    %75 = vector.extract %74[0, 0, 0] : f32 from vector<1x1x1xf32>
    %c0_37 = arith.constant 0 : index
    %c0_38 = arith.constant 0 : index
    %76 = memref.load %arg11[%c0_37, %c0_38] : memref<1x1xf32, #tpu.memory_space<smem>>
    memref.store %75, %arg11[%c0_37, %c0_38] : memref<1x1xf32, #tpu.memory_space<smem>>
    %77 = vector.shape_cast %64 : vector<2x128xf32> to vector<1x2x128xf32>
    %cst_39 = arith.constant dense<0.000000e+00> : vector<1xf32>
    %78 = vector.multi_reduction <add>, %77, %cst_39 [1, 2] : vector<1x2x128xf32> to vector<1xf32>
    %79 = vector.shape_cast %78 : vector<1xf32> to vector<1x1x1xf32>
    %80 = vector.extract %79[0, 0, 0] : f32 from vector<1x1x1xf32>
    %c0_40 = arith.constant 0 : index
    %c0_41 = arith.constant 0 : index
    %81 = memref.load %arg12[%c0_40, %c0_41] : memref<1x1xf32, #tpu.memory_space<smem>>
    memref.store %80, %arg12[%c0_40, %c0_41] : memref<1x1xf32, #tpu.memory_space<smem>>
    return
  }
}

</mosaic_0001>

<llo_original>
// kernel: forward.21
$region0: #{forward.21}
  #allocation0 [shape = 'u32[]', space=smem, size = 0x4, offset = 0x4, fixed_abs, tag = 'smem constant byte address 0x4 - core index']
  #allocation1 [shape = 'u32[72,128]{1,0:T(1,128)}', space=vmem, size = 0x9000, scoped, tag = 'internal scratch']
  %s0 = inlined_call_operand.vmem [shape: f32[2], index: 0, kind: input, shape index: {}]
  %s1 = inlined_call_operand.vmem [shape: f32[2,128], index: 1, kind: input, shape index: {}]
  %s2 = inlined_call_operand.vmem [shape: f32[2,128], index: 2, kind: input, shape index: {}]
  %s3 = inlined_call_operand.vmem [shape: f32[2,128], index: 3, kind: input, shape index: {}]
  %s4 = inlined_call_operand.vmem [shape: f32[2,128], index: 4, kind: input, shape index: {}]
  %s5 = inlined_call_operand.vmem [shape: f32[2,128], index: 5, kind: input, shape index: {}]
  %s6 = inlined_call_operand.vmem [shape: f32[2,128,128], index: 6, kind: input, shape index: {}]
  %s7 = inlined_call_operand.vmem [shape: f32[128,128], index: 7, kind: input, shape index: {}]
  %s8 = inlined_call_operand.vmem [shape: f32[128,1], index: 8, kind: input, shape index: {}]
  %s9 = inlined_call_operand.vmem [shape: f32[128,1], index: 9, kind: input, shape index: {}]
  %s10 = inlined_call_operand.vmem [shape: f32[1,128], index: 10, kind: input, shape index: {}]
  %s11 = inlined_call_operand.hbm [shape: f32[1,1], index: 11, kind: output, shape index: {0}]
  %s12 = inlined_call_operand.hbm [shape: f32[1,1], index: 12, kind: output, shape index: {1}]
  %13 = xla_tuple %s11, %s12
  %s14 = sld [smem:[#allocation0]]
  $region66: #{forward.21} parent=0
    _
  %s16 = ssub.s32 1, %s14
  %s17 = scalar_select 0, %s16, %s14
  $region1: #{forward.21} parent=0
    #allocation2 [shape = 'u8[512]{0}', space=smem, size = 0x200, scoped, tag = 'input window, operand 0, single buffered']
    #allocation3 [shape = 's32[1]{0}', space=sflag, size = 0x4, scoped, tag = 'scoped memory for forward.21']
    #allocation4 [shape = 's32[1]{0}', space=sflag, size = 0x4, scoped, tag = 'scoped memory for forward.21']
    #allocation5 [shape = 'u8[512]{0}', space=smem, size = 0x200, scoped, tag = 'output window, operand 0, single buffered']
    #allocation6 [shape = 'u8[512]{0}', space=smem, size = 0x200, scoped, tag = 'output window, operand 1, single buffered']
    #allocation7 [shape = 's32[1]{0}', space=sflag, size = 0x4, scoped, tag = 'scoped memory for forward.21']
    %18 = vsyncpa [#allocation4], 0
    %19 = vsyncpa [#allocation3], 0
    %20 = vsyncpa [#allocation7], 0
    // Predicated region
    $region2: #{forward.21} parent=1 // pred_check
      _
    $region3: #{forward.21} parent=1 // pred_check_branch
      %22 = sbr.rel (0) target = $region5
    $region4: #{forward.21} parent=1 // pred_region
      %24 = vsyncadd [#allocation4], 0
      %s26 = sshll.u32 %s0, 4
      %s27 = int_to_ptr.vmem [resolvable:$true] %s26
      %29 = dma.vmem_to_smem %s27, 16, [#allocation2], [#allocation4]
    $region5: #{forward.21} parent=1 // pred_fallthru
      _
    // Predicated region
    $region6: #{forward.21} parent=1 // pred_check
      _
    $region7: #{forward.21} parent=1 // pred_check_branch
      %31 = sbr.rel (0) target = $region9
    $region8: #{forward.21} parent=1 // pred_region
      _
    $region9: #{forward.21} parent=1 // pred_fallthru
      _
    // Predicated region
    $region10: #{forward.21} parent=1 // pred_check
      _
    $region11: #{forward.21} parent=1 // pred_check_branch
      %33 = sbr.rel (0) target = $region13
    $region12: #{forward.21} parent=1 // pred_region
      _
    $region13: #{forward.21} parent=1 // pred_fallthru
      _
    // Predicated region
    $region14: #{forward.21} parent=1 // pred_check
      _
    $region15: #{forward.21} parent=1 // pred_check_branch
      %35 = sbr.rel (0) target = $region17
    $region16: #{forward.21} parent=1 // pred_region
      _
    $region17: #{forward.21} parent=1 // pred_fallthru
      _
    // Predicated region
    $region18: #{forward.21} parent=1 // pred_check
      _
    $region19: #{forward.21} parent=1 // pred_check_branch
      %37 = sbr.rel (0) target = $region21
    $region20: #{forward.21} parent=1 // pred_region
      _
    $region21: #{forward.21} parent=1 // pred_fallthru
      _
    // Predicated region
    $region22: #{forward.21} parent=1 // pred_check
      _
    $region23: #{forward.21} parent=1 // pred_check_branch
      %39 = sbr.rel (0) target = $region25
    $region24: #{forward.21} parent=1 // pred_region
      _
    $region25: #{forward.21} parent=1 // pred_fallthru
      _
    // Predicated region
    $region26: #{forward.21} parent=1 // pred_check
      _
    $region27: #{forward.21} parent=1 // pred_check_branch
      %41 = sbr.rel (0) target = $region29
    $region28: #{forward.21} parent=1 // pred_region
      _
    $region29: #{forward.21} parent=1 // pred_fallthru
      _
    // Predicated region
    $region30: #{forward.21} parent=1 // pred_check
      _
    $region31: #{forward.21} parent=1 // pred_check_branch
      %43 = sbr.rel (0) target = $region33
    $region32: #{forward.21} parent=1 // pred_region
      _
    $region33: #{forward.21} parent=1 // pred_fallthru
      _
    // Predicated region
    $region34: #{forward.21} parent=1 // pred_check
      _
    $region35: #{forward.21} parent=1 // pred_check_branch
      %45 = sbr.rel (0) target = $region37
    $region36: #{forward.21} parent=1 // pred_region
      _
    $region37: #{forward.21} parent=1 // pred_fallthru
      _
    // Predicated region
    $region38: #{forward.21} parent=1 // pred_check
      _
    $region39: #{forward.21} parent=1 // pred_check_branch
      %47 = sbr.rel (0) target = $region41
    $region40: #{forward.21} parent=1 // pred_region
      _
    $region41: #{forward.21} parent=1 // pred_fallthru
      _
    // Predicated region
    $region42: #{forward.21} parent=1 // pred_check
      _
    $region43: #{forward.21} parent=1 // pred_check_branch
      %49 = sbr.rel (0) target = $region45
    $region44: #{forward.21} parent=1 // pred_region
      _
    $region45: #{forward.21} parent=1 // pred_fallthru
      _
    // Predicated region
    $region46: #{forward.21} parent=1 // pred_check
      _
    $region47: #{forward.21} parent=1 // pred_check_branch
      %51 = sbr.rel (0) target = $region49
    $region48: #{forward.21} parent=1 // pred_region
      %53 = dma.done [#allocation4], 16
    $region49: #{forward.21} parent=1 // pred_fallthru
      _
    %54 = sfence
    %v55 = vld [vmem:[%s1] sm:$0x3]
    %v56 = vld [vmem:[%s2] sm:$0x3]
    %v57 = vld [vmem:[%s3] sm:$0x3]
    %v58 = vld [vmem:[%s4] sm:$0x3]
    %v59 = vld [vmem:[%s5] sm:$0x3]
    %v60 = vlaneseq
    %v61 = vshrl.u32 %v60, 7
    %s62 = sld [smem:[#allocation2]]
    %v63 = vstv %s62
    %vm64 = vcmp.eq.s32.totalorder %v61, 1
    %s65 = sld [smem:[#allocation2 + $0x1]]
    %v66 = vstv %s65
    %v67 = vsel %vm64, %v66, %v63
    %v68 = vmul.f32 %v57, -0.2
    %v69 = vmul.f32 %v68, 1.442695
    %v70 = vpow.pop %v69
    %v71 = vadd.f32 %v70, 1.0
    %v72 = vrcp.pop %v71
    %v73 = vmul.f32 %v71, %v72
    %v74 = vsub.f32 1.0, %v73
    %v75 = vmul.f32 %v72, %v74
    %v76 = vadd.f32 %v72, %v75
    %vm77 = vweird.f32 %v71
    %vm78 = vweird.f32 %v72
    %vm79 = vmor %vm77, %vm78
    %v80 = vsel %vm79, %v72, %v76
    %v81 = vand.u32 2147483647, %v71
    %vm82 = vcmp.eq.f32.partialorder %v81, 8.507059e+37
    %v83 = vand.u32 %v71, 2147483648
    %v84 = vor.u32 1.1754944e-38, %v83
    %v85 = vsel %vm82, %v84, %v80
    %v86 = vmul.f32 4.0, %v85
    %v87 = vadd.f32 %v86, -1.0
    %v88 = vmul.f32 %v56, %v67
    %v89 = vmul.f32 %v88, %v87
    %v90 = vadd.f32 %v55, %v89
    %v91 = vsub.f32 %v90, %v55
    %v92 = vsub.f32 0.0, %v91
    %v93 = vmul.f32 %v67, %v67
    %v94 = vrcp.pop %v93
    %v95 = vmul.f32 %v93, %v94
    %v96 = vsub.f32 1.0, %v95
    %v97 = vmul.f32 %v94, %v96
    %v98 = vadd.f32 %v94, %v97
    %vm99 = vweird.f32 %v93
    %vm100 = vweird.f32 %v94
    %vm101 = vmor %vm99, %vm100
    %v102 = vsel %vm101, %v94, %v98
    %v103 = vand.u32 2147483647, %v93
    %vm104 = vcmp.eq.f32.partialorder %v103, 8.507059e+37
    %v105 = vand.u32 %v93, 2147483648
    %v106 = vor.u32 1.1754944e-38, %v105
    %v107 = vsel %vm104, %v106, %v102
    %v108 = vmul.f32 %v92, %v107
    %v109 = vsub.f32 1.0, %v58
    %v110 = vmul.f32 %v109, %v90
    %v111 = vld [vmem:[%s7] sm:$0xff]
    %v112 = vld [vmem:[%s7 + $0x8] sm:$0xff]
    %v113 = vld [vmem:[%s7 + $0x10] sm:$0xff]
    %v114 = vld [vmem:[%s7 + $0x18] sm:$0xff]
    %v115 = vld [vmem:[%s7 + $0x20] sm:$0xff]
    %v116 = vld [vmem:[%s7 + $0x28] sm:$0xff]
    %v117 = vld [vmem:[%s7 + $0x30] sm:$0xff]
    %v118 = vld [vmem:[%s7 + $0x38] sm:$0xff]
    %v119 = vld [vmem:[%s7 + $0x40] sm:$0xff]
    %v120 = vld [vmem:[%s7 + $0x48] sm:$0xff]
    %v121 = vld [vmem:[%s7 + $0x50] sm:$0xff]
    %v122 = vld [vmem:[%s7 + $0x58] sm:$0xff]
    %v123 = vld [vmem:[%s7 + $0x60] sm:$0xff]
    %v124 = vld [vmem:[%s7 + $0x68] sm:$0xff]
    %v125 = vld [vmem:[%s7 + $0x70] sm:$0xff]
    %v126 = vld [vmem:[%s7 + $0x78] sm:$0xff]
    %v127 = vld [vmem:[%s8] sm:$0xff]
    %v128 = vld [vmem:[%s8 + $0x8] sm:$0xff]
    %v129 = vld [vmem:[%s8 + $0x10] sm:$0xff]
    %v130 = vld [vmem:[%s8 + $0x18] sm:$0xff]
    %v131 = vld [vmem:[%s8 + $0x20] sm:$0xff]
    %v132 = vld [vmem:[%s8 + $0x28] sm:$0xff]
    %v133 = vld [vmem:[%s8 + $0x30] sm:$0xff]
    %v134 = vld [vmem:[%s8 + $0x38] sm:$0xff]
    %v135 = vld [vmem:[%s8 + $0x40] sm:$0xff]
    %v136 = vld [vmem:[%s8 + $0x48] sm:$0xff]
    %v137 = vld [vmem:[%s8 + $0x50] sm:$0xff]
    %v138 = vld [vmem:[%s8 + $0x58] sm:$0xff]
    %v139 = vld [vmem:[%s8 + $0x60] sm:$0xff]
    %v140 = vld [vmem:[%s8 + $0x68] sm:$0xff]
    %v141 = vld [vmem:[%s8 + $0x70] sm:$0xff]
    %v142 = vld [vmem:[%s8 + $0x78] sm:$0xff]
    %v143 = vld [vmem:[%s9] sm:$0xff]
    %v144 = vld [vmem:[%s9 + $0x8] sm:$0xff]
    %v145 = vld [vmem:[%s9 + $0x10] sm:$0xff]
    %v146 = vld [vmem:[%s9 + $0x18] sm:$0xff]
    %v147 = vld [vmem:[%s9 + $0x20] sm:$0xff]
    %v148 = vld [vmem:[%s9 + $0x28] sm:$0xff]
    %v149 = vld [vmem:[%s9 + $0x30] sm:$0xff]
    %v150 = vld [vmem:[%s9 + $0x38] sm:$0xff]
    %v151 = vld [vmem:[%s9 + $0x40] sm:$0xff]
    %v152 = vld [vmem:[%s9 + $0x48] sm:$0xff]
    %v153 = vld [vmem:[%s9 + $0x50] sm:$0xff]
    %v154 = vld [vmem:[%s9 + $0x58] sm:$0xff]
    %v155 = vld [vmem:[%s9 + $0x60] sm:$0xff]
    %v156 = vld [vmem:[%s9 + $0x68] sm:$0xff]
    %v157 = vld [vmem:[%s9 + $0x70] sm:$0xff]
    %v158 = vld [vmem:[%s9 + $0x78] sm:$0xff]
    %v159 = vld [vmem:[%s10] sm:$0x1]
    %v160 = vld [vmem:[%s6] sm:$0xff]
    %v161 = vld [vmem:[%s6 + $0x8] sm:$0xff]
    %v162 = vld [vmem:[%s6 + $0x10] sm:$0xff]
    %v163 = vld [vmem:[%s6 + $0x18] sm:$0xff]
    %v164 = vld [vmem:[%s6 + $0x20] sm:$0xff]
    %v165 = vld [vmem:[%s6 + $0x28] sm:$0xff]
    %v166 = vld [vmem:[%s6 + $0x30] sm:$0xff]
    %v167 = vld [vmem:[%s6 + $0x38] sm:$0xff]
    %v168 = vld [vmem:[%s6 + $0x40] sm:$0xff]
    %v169 = vld [vmem:[%s6 + $0x48] sm:$0xff]
    %v170 = vld [vmem:[%s6 + $0x50] sm:$0xff]
    %v171 = vld [vmem:[%s6 + $0x58] sm:$0xff]
    %v172 = vld [vmem:[%s6 + $0x60] sm:$0xff]
    %v173 = vld [vmem:[%s6 + $0x68] sm:$0xff]
    %v174 = vld [vmem:[%s6 + $0x70] sm:$0xff]
    %v175 = vld [vmem:[%s6 + $0x78] sm:$0xff]
    %177 = vset.pattern.permute.xlu0 0
    %178 = vperm.xlu0 %177, %v127
    %v179 = vpop.permute.xlu0 %178
    %182 = vset.pattern.permute.xlu0 0
    %183 = vperm.xlu0 %182, %v128
    %v184 = vpop.permute.xlu0 %183
    %187 = vset.pattern.permute.xlu0 0
    %188 = vperm.xlu0 %187, %v129
    %v189 = vpop.permute.xlu0 %188
    %192 = vset.pattern.permute.xlu0 0
    %193 = vperm.xlu0 %192, %v130
    %v194 = vpop.permute.xlu0 %193
    %197 = vset.pattern.permute.xlu0 0
    %198 = vperm.xlu0 %197, %v131
    %v199 = vpop.permute.xlu0 %198
    %202 = vset.pattern.permute.xlu0 0
    %203 = vperm.xlu0 %202, %v132
    %v204 = vpop.permute.xlu0 %203
    %207 = vset.pattern.permute.xlu0 0
    %208 = vperm.xlu0 %207, %v133
    %v209 = vpop.permute.xlu0 %208
    %212 = vset.pattern.permute.xlu0 0
    %213 = vperm.xlu0 %212, %v134
    %v214 = vpop.permute.xlu0 %213
    %217 = vset.pattern.permute.xlu0 0
    %218 = vperm.xlu0 %217, %v135
    %v219 = vpop.permute.xlu0 %218
    %222 = vset.pattern.permute.xlu0 0
    %223 = vperm.xlu0 %222, %v136
    %v224 = vpop.permute.xlu0 %223
    %227 = vset.pattern.permute.xlu0 0
    %228 = vperm.xlu0 %227, %v137
    %v229 = vpop.permute.xlu0 %228
    %232 = vset.pattern.permute.xlu0 0
    %233 = vperm.xlu0 %232, %v138
    %v234 = vpop.permute.xlu0 %233
    %237 = vset.pattern.permute.xlu0 0
    %238 = vperm.xlu0 %237, %v139
    %v239 = vpop.permute.xlu0 %238
    %242 = vset.pattern.permute.xlu0 0
    %243 = vperm.xlu0 %242, %v140
    %v244 = vpop.permute.xlu0 %243
    %247 = vset.pattern.permute.xlu0 0
    %248 = vperm.xlu0 %247, %v141
    %v249 = vpop.permute.xlu0 %248
    %252 = vset.pattern.permute.xlu0 0
    %253 = vperm.xlu0 %252, %v142
    %v254 = vpop.permute.xlu0 %253
    %v256 = vperm.slane %v110, 0
    %v257 = vmul.f32 %v179, %v256
    %v258 = vmul.f32 %v184, %v256
    %v259 = vmul.f32 %v189, %v256
    %v260 = vmul.f32 %v194, %v256
    %v261 = vmul.f32 %v199, %v256
    %v262 = vmul.f32 %v204, %v256
    %v263 = vmul.f32 %v209, %v256
    %v264 = vmul.f32 %v214, %v256
    %v265 = vmul.f32 %v219, %v256
    %v266 = vmul.f32 %v224, %v256
    %v267 = vmul.f32 %v229, %v256
    %v268 = vmul.f32 %v234, %v256
    %v269 = vmul.f32 %v239, %v256
    %v270 = vmul.f32 %v244, %v256
    %v271 = vmul.f32 %v249, %v256
    %v272 = vmul.f32 %v254, %v256
    %273 = vmatpush.msra.mxu0 %v175
    %274 = vmatpush.msra.mxu0 %v174
    %275 = vmatpush.msra.mxu0 %v173
    %276 = vmatpush.msra.mxu0 %v172
    %277 = vmatpush.msra.mxu0 %v171
    %278 = vmatpush.msra.mxu0 %v170
    %279 = vmatpush.msra.mxu0 %v169
    %280 = vmatpush.msra.mxu0 %v168
    %281 = vmatpush.msra.mxu0 %v167
    %282 = vmatpush.msra.mxu0 %v166
    %283 = vmatpush.msra.mxu0 %v165
    %284 = vmatpush.msra.mxu0 %v164
    %285 = vmatpush.msra.mxu0 %v163
    %286 = vmatpush.msra.mxu0 %v162
    %287 = vmatpush.msra.mxu0 %v161
    %288 = vmatpush.msra.mxu0 %v160
    %289 = vmatmul.f32.gmra.mxu0 %v111
    %v290 = vpop.f32.mrf.mxu0
    %v291 = vadd.f32 %v257, %v290
    %292 = vmatmul.f32.gmra.mxu0 %v112
    %v293 = vpop.f32.mrf.mxu0
    %v294 = vadd.f32 %v258, %v293
    %295 = vmatmul.f32.gmra.mxu0 %v113
    %v296 = vpop.f32.mrf.mxu0
    %v297 = vadd.f32 %v259, %v296
    %298 = vmatmul.f32.gmra.mxu0 %v114
    %v299 = vpop.f32.mrf.mxu0
    %v300 = vadd.f32 %v260, %v299
    %301 = vmatmul.f32.gmra.mxu0 %v115
    %v302 = vpop.f32.mrf.mxu0
    %v303 = vadd.f32 %v261, %v302
    %304 = vmatmul.f32.gmra.mxu0 %v116
    %v305 = vpop.f32.mrf.mxu0
    %v306 = vadd.f32 %v262, %v305
    %307 = vmatmul.f32.gmra.mxu0 %v117
    %v308 = vpop.f32.mrf.mxu0
    %v309 = vadd.f32 %v263, %v308
    %310 = vmatmul.f32.gmra.mxu0 %v118
    %v311 = vpop.f32.mrf.mxu0
    %v312 = vadd.f32 %v264, %v311
    %313 = vmatmul.f32.gmra.mxu0 %v119
    %v314 = vpop.f32.mrf.mxu0
    %v315 = vadd.f32 %v265, %v314
    %316 = vmatmul.f32.gmra.mxu0 %v120
    %v317 = vpop.f32.mrf.mxu0
    %v318 = vadd.f32 %v266, %v317
    %319 = vmatmul.f32.gmra.mxu0 %v121
    %v320 = vpop.f32.mrf.mxu0
    %v321 = vadd.f32 %v267, %v320
    %322 = vmatmul.f32.gmra.mxu0 %v122
    %v323 = vpop.f32.mrf.mxu0
    %v324 = vadd.f32 %v268, %v323
    %325 = vmatmul.f32.gmra.mxu0 %v123
    %v326 = vpop.f32.mrf.mxu0
    %v327 = vadd.f32 %v269, %v326
    %328 = vmatmul.f32.gmra.mxu0 %v124
    %v329 = vpop.f32.mrf.mxu0
    %v330 = vadd.f32 %v270, %v329
    %331 = vmatmul.f32.gmra.mxu0 %v125
    %v332 = vpop.f32.mrf.mxu0
    %v333 = vadd.f32 %v271, %v332
    %334 = vmatmul.f32.gmra.mxu0 %v126
    %v335 = vpop.f32.mrf.mxu0
    %v336 = vadd.f32 %v272, %v335
    %337 = vdwg.mxu0
    %339 = vset.pattern.permute.xlu0 0
    %340 = vperm.xlu0 %339, %v143
    %v341 = vpop.permute.xlu0 %340
    %344 = vset.pattern.permute.xlu0 0
    %345 = vperm.xlu0 %344, %v144
    %v346 = vpop.permute.xlu0 %345
    %349 = vset.pattern.permute.xlu0 0
    %350 = vperm.xlu0 %349, %v145
    %v351 = vpop.permute.xlu0 %350
    %354 = vset.pattern.permute.xlu0 0
    %355 = vperm.xlu0 %354, %v146
    %v356 = vpop.permute.xlu0 %355
    %359 = vset.pattern.permute.xlu0 0
    %360 = vperm.xlu0 %359, %v147
    %v361 = vpop.permute.xlu0 %360
    %364 = vset.pattern.permute.xlu0 0
    %365 = vperm.xlu0 %364, %v148
    %v366 = vpop.permute.xlu0 %365
    %369 = vset.pattern.permute.xlu0 0
    %370 = vperm.xlu0 %369, %v149
    %v371 = vpop.permute.xlu0 %370
    %374 = vset.pattern.permute.xlu0 0
    %375 = vperm.xlu0 %374, %v150
    %v376 = vpop.permute.xlu0 %375
    %379 = vset.pattern.permute.xlu0 0
    %380 = vperm.xlu0 %379, %v151
    %v381 = vpop.permute.xlu0 %380
    %384 = vset.pattern.permute.xlu0 0
    %385 = vperm.xlu0 %384, %v152
    %v386 = vpop.permute.xlu0 %385
    %389 = vset.pattern.permute.xlu0 0
    %390 = vperm.xlu0 %389, %v153
    %v391 = vpop.permute.xlu0 %390
    %394 = vset.pattern.permute.xlu0 0
    %395 = vperm.xlu0 %394, %v154
    %v396 = vpop.permute.xlu0 %395
    %399 = vset.pattern.permute.xlu0 0
    %400 = vperm.xlu0 %399, %v155
    %v401 = vpop.permute.xlu0 %400
    %404 = vset.pattern.permute.xlu0 0
    %405 = vperm.xlu0 %404, %v156
    %v406 = vpop.permute.xlu0 %405
    %409 = vset.pattern.permute.xlu0 0
    %410 = vperm.xlu0 %409, %v157
    %v411 = vpop.permute.xlu0 %410
    %414 = vset.pattern.permute.xlu0 0
    %415 = vperm.xlu0 %414, %v158
    %v416 = vpop.permute.xlu0 %415
    %v418 = vadd.f32 %v291, %v341
    %v419 = vadd.f32 %v294, %v346
    %v420 = vadd.f32 %v297, %v351
    %v421 = vadd.f32 %v300, %v356
    %v422 = vadd.f32 %v303, %v361
    %v423 = vadd.f32 %v306, %v366
    %v424 = vadd.f32 %v309, %v371
    %v425 = vadd.f32 %v312, %v376
    %v426 = vadd.f32 %v315, %v381
    %v427 = vadd.f32 %v318, %v386
    %v428 = vadd.f32 %v321, %v391
    %v429 = vadd.f32 %v324, %v396
    %v430 = vadd.f32 %v327, %v401
    %v431 = vadd.f32 %v330, %v406
    %v432 = vadd.f32 %v333, %v411
    %v433 = vadd.f32 %v336, %v416
    %v434 = vmax.f32 %v418, 0.0
    %v435 = vmax.f32 %v419, 0.0
    %v436 = vmax.f32 %v420, 0.0
    %v437 = vmax.f32 %v421, 0.0
    %v438 = vmax.f32 %v422, 0.0
    %v439 = vmax.f32 %v423, 0.0
    %v440 = vmax.f32 %v424, 0.0
    %v441 = vmax.f32 %v425, 0.0
    %v442 = vmax.f32 %v426, 0.0
    %v443 = vmax.f32 %v427, 0.0
    %v444 = vmax.f32 %v428, 0.0
    %v445 = vmax.f32 %v429, 0.0
    %v446 = vmax.f32 %v430, 0.0
    %v447 = vmax.f32 %v431, 0.0
    %v448 = vmax.f32 %v432, 0.0
    %v449 = vmax.f32 %v433, 0.0
    %450 = vmatpush.msra.mxu0 %v449
    %451 = vmatpush.msra.mxu0 %v448
    %452 = vmatpush.msra.mxu0 %v447
    %453 = vmatpush.msra.mxu0 %v446
    %454 = vmatpush.msra.mxu0 %v445
    %455 = vmatpush.msra.mxu0 %v444
    %456 = vmatpush.msra.mxu0 %v443
    %457 = vmatpush.msra.mxu0 %v442
    %458 = vmatpush.msra.mxu0 %v441
    %459 = vmatpush.msra.mxu0 %v440
    %460 = vmatpush.msra.mxu0 %v439
    %461 = vmatpush.msra.mxu0 %v438
    %462 = vmatpush.msra.mxu0 %v437
    %463 = vmatpush.msra.mxu0 %v436
    %464 = vmatpush.msra.mxu0 %v435
    %465 = vmatpush.msra.mxu0 %v434
    %466 = vmatmul.f32.gmra.mxu0 %v159
    %v467 = vpop.f32.mrf.mxu0
    %v468 = vadd.f32 0.0, %v467
    %469 = vdwg.mxu0
    %s470 = scalar_lea.vmem %s6, 128
    %v471 = vld [vmem:[%s470] sm:$0xff]
    %v472 = vld [vmem:[%s470 + $0x8] sm:$0xff]
    %v473 = vld [vmem:[%s470 + $0x10] sm:$0xff]
    %v474 = vld [vmem:[%s470 + $0x18] sm:$0xff]
    %v475 = vld [vmem:[%s470 + $0x20] sm:$0xff]
    %v476 = vld [vmem:[%s470 + $0x28] sm:$0xff]
    %v477 = vld [vmem:[%s470 + $0x30] sm:$0xff]
    %v478 = vld [vmem:[%s470 + $0x38] sm:$0xff]
    %v479 = vld [vmem:[%s470 + $0x40] sm:$0xff]
    %v480 = vld [vmem:[%s470 + $0x48] sm:$0xff]
    %v481 = vld [vmem:[%s470 + $0x50] sm:$0xff]
    %v482 = vld [vmem:[%s470 + $0x58] sm:$0xff]
    %v483 = vld [vmem:[%s470 + $0x60] sm:$0xff]
    %v484 = vld [vmem:[%s470 + $0x68] sm:$0xff]
    %v485 = vld [vmem:[%s470 + $0x70] sm:$0xff]
    %v486 = vld [vmem:[%s470 + $0x78] sm:$0xff]
    %v487 = vperm.slane %v110, 1
    %v488 = vmul.f32 %v179, %v487
    %v489 = vmul.f32 %v184, %v487
    %v490 = vmul.f32 %v189, %v487
    %v491 = vmul.f32 %v194, %v487
    %v492 = vmul.f32 %v199, %v487
    %v493 = vmul.f32 %v204, %v487
    %v494 = vmul.f32 %v209, %v487
    %v495 = vmul.f32 %v214, %v487
    %v496 = vmul.f32 %v219, %v487
    %v497 = vmul.f32 %v224, %v487
    %v498 = vmul.f32 %v229, %v487
    %v499 = vmul.f32 %v234, %v487
    %v500 = vmul.f32 %v239, %v487
    %v501 = vmul.f32 %v244, %v487
    %v502 = vmul.f32 %v249, %v487
    %v503 = vmul.f32 %v254, %v487
    %504 = vmatpush.msra.mxu0 %v486
    %505 = vmatpush.msra.mxu0 %v485
    %506 = vmatpush.msra.mxu0 %v484
    %507 = vmatpush.msra.mxu0 %v483
    %508 = vmatpush.msra.mxu0 %v482
    %509 = vmatpush.msra.mxu0 %v481
    %510 = vmatpush.msra.mxu0 %v480
    %511 = vmatpush.msra.mxu0 %v479
    %512 = vmatpush.msra.mxu0 %v478
    %513 = vmatpush.msra.mxu0 %v477
    %514 = vmatpush.msra.mxu0 %v476
    %515 = vmatpush.msra.mxu0 %v475
    %516 = vmatpush.msra.mxu0 %v474
    %517 = vmatpush.msra.mxu0 %v473
    %518 = vmatpush.msra.mxu0 %v472
    %519 = vmatpush.msra.mxu0 %v471
    %520 = vmatmul.f32.gmra.mxu0 %v111
    %v521 = vpop.f32.mrf.mxu0
    %v522 = vadd.f32 %v488, %v521
    %523 = vmatmul.f32.gmra.mxu0 %v112
    %v524 = vpop.f32.mrf.mxu0
    %v525 = vadd.f32 %v489, %v524
    %526 = vmatmul.f32.gmra.mxu0 %v113
    %v527 = vpop.f32.mrf.mxu0
    %v528 = vadd.f32 %v490, %v527
    %529 = vmatmul.f32.gmra.mxu0 %v114
    %v530 = vpop.f32.mrf.mxu0
    %v531 = vadd.f32 %v491, %v530
    %532 = vmatmul.f32.gmra.mxu0 %v115
    %v533 = vpop.f32.mrf.mxu0
    %v534 = vadd.f32 %v492, %v533
    %535 = vmatmul.f32.gmra.mxu0 %v116
    %v536 = vpop.f32.mrf.mxu0
    %v537 = vadd.f32 %v493, %v536
    %538 = vmatmul.f32.gmra.mxu0 %v117
    %v539 = vpop.f32.mrf.mxu0
    %v540 = vadd.f32 %v494, %v539
    %541 = vmatmul.f32.gmra.mxu0 %v118
    %v542 = vpop.f32.mrf.mxu0
    %v543 = vadd.f32 %v495, %v542
    %544 = vmatmul.f32.gmra.mxu0 %v119
    %v545 = vpop.f32.mrf.mxu0
    %v546 = vadd.f32 %v496, %v545
    %547 = vmatmul.f32.gmra.mxu0 %v120
    %v548 = vpop.f32.mrf.mxu0
    %v549 = vadd.f32 %v497, %v548
    %550 = vmatmul.f32.gmra.mxu0 %v121
    %v551 = vpop.f32.mrf.mxu0
    %v552 = vadd.f32 %v498, %v551
    %553 = vmatmul.f32.gmra.mxu0 %v122
    %v554 = vpop.f32.mrf.mxu0
    %v555 = vadd.f32 %v499, %v554
    %556 = vmatmul.f32.gmra.mxu0 %v123
    %v557 = vpop.f32.mrf.mxu0
    %v558 = vadd.f32 %v500, %v557
    %559 = vmatmul.f32.gmra.mxu0 %v124
    %v560 = vpop.f32.mrf.mxu0
    %v561 = vadd.f32 %v501, %v560
    %562 = vmatmul.f32.gmra.mxu0 %v125
    %v563 = vpop.f32.mrf.mxu0
    %v564 = vadd.f32 %v502, %v563
    %565 = vmatmul.f32.gmra.mxu0 %v126
    %v566 = vpop.f32.mrf.mxu0
    %v567 = vadd.f32 %v503, %v566
    %568 = vdwg.mxu0
    %v569 = vadd.f32 %v522, %v341
    %v570 = vadd.f32 %v525, %v346
    %v571 = vadd.f32 %v528, %v351
    %v572 = vadd.f32 %v531, %v356
    %v573 = vadd.f32 %v534, %v361
    %v574 = vadd.f32 %v537, %v366
    %v575 = vadd.f32 %v540, %v371
    %v576 = vadd.f32 %v543, %v376
    %v577 = vadd.f32 %v546, %v381
    %v578 = vadd.f32 %v549, %v386
    %v579 = vadd.f32 %v552, %v391
    %v580 = vadd.f32 %v555, %v396
    %v581 = vadd.f32 %v558, %v401
    %v582 = vadd.f32 %v561, %v406
    %v583 = vadd.f32 %v564, %v411
    %v584 = vadd.f32 %v567, %v416
    %v585 = vmax.f32 %v569, 0.0
    %v586 = vmax.f32 %v570, 0.0
    %v587 = vmax.f32 %v571, 0.0
    %v588 = vmax.f32 %v572, 0.0
    %v589 = vmax.f32 %v573, 0.0
    %v590 = vmax.f32 %v574, 0.0
    %v591 = vmax.f32 %v575, 0.0
    %v592 = vmax.f32 %v576, 0.0
    %v593 = vmax.f32 %v577, 0.0
    %v594 = vmax.f32 %v578, 0.0
    %v595 = vmax.f32 %v579, 0.0
    %v596 = vmax.f32 %v580, 0.0
    %v597 = vmax.f32 %v581, 0.0
    %v598 = vmax.f32 %v582, 0.0
    %v599 = vmax.f32 %v583, 0.0
    %v600 = vmax.f32 %v584, 0.0
    %601 = vmatpush.msra.mxu0 %v600
    %602 = vmatpush.msra.mxu0 %v599
    %603 = vmatpush.msra.mxu0 %v598
    %604 = vmatpush.msra.mxu0 %v597
    %605 = vmatpush.msra.mxu0 %v596
    %606 = vmatpush.msra.mxu0 %v595
    %607 = vmatpush.msra.mxu0 %v594
    %608 = vmatpush.msra.mxu0 %v593
    %609 = vmatpush.msra.mxu0 %v592
    %610 = vmatpush.msra.mxu0 %v591
    %611 = vmatpush.msra.mxu0 %v590
    %612 = vmatpush.msra.mxu0 %v589
    %613 = vmatpush.msra.mxu0 %v588
    %614 = vmatpush.msra.mxu0 %v587
    %615 = vmatpush.msra.mxu0 %v586
    %616 = vmatpush.msra.mxu0 %v585
    %617 = vmatmul.f32.gmra.mxu0 %v159
    %v618 = vpop.f32.mrf.mxu0
    %v619 = vadd.f32 0.0, %v618
    %620 = vdwg.mxu0
    %v622 = vrot.slane %v619, 7
    %vm624 = vcmask 1040384
    %v625 = vsel %vm624, %v468, %v622
    %v626 = vsub.f32 %v59, %v58
    %v627 = vsub.f32 %v625, %v108
    %v628 = vmul.f32 %v627, %v626
    %v629 = vmul.f32 %v628, 0.5
    %v630 = vmul.f32 %v629, %v628
    %v631 = vmul.f32 %v630, %v93
    %vm632 = vcmask 1041408
    %v633 = vsel %vm632, %v631, 0.0
    %634 = vadd.xlane.f32.xlu0 %v633
    %v635 = vpop.xlane.xlu0 %634
    %v636 = vrot.slane %v635, 4
    %v637 = vadd.f32 %v635, %v636
    %v638 = vrot.slane %v637, 2
    %v639 = vadd.f32 %v637, %v638
    %v640 = vrot.slane %v639, 1
    %v641 = vadd.f32 %v639, %v640
    %s642 = vtos %v641
    %s643 = scalar_lea.smem [#allocation5], 0
    %644 = sst [smem:[%s643]] %s642
    %v645 = vsel %vm632, %v626, 0.0
    %646 = vadd.xlane.f32.xlu0 %v645
    %v647 = vpop.xlane.xlu0 %646
    %v648 = vrot.slane %v647, 4
    %v649 = vadd.f32 %v647, %v648
    %v650 = vrot.slane %v649, 2
    %v651 = vadd.f32 %v649, %v650
    %v652 = vrot.slane %v651, 1
    %v653 = vadd.f32 %v651, %v652
    %s654 = vtos %v653
    %s655 = scalar_lea.smem [#allocation6], 0
    %656 = sst [smem:[%s655]] %s654
    // Predicated region
    $region50: #{forward.21} parent=1 // pred_check
      _
    $region51: #{forward.21} parent=1 // pred_check_branch
      %658 = sbr.rel (0) target = $region53
    $region52: #{forward.21} parent=1 // pred_region
      %660 = vsyncadd [#allocation3], 0
      %s662 = sshll.u32 %s11, 4
      %s663 = int_to_ptr.hbm [resolvable:$true] %s662
      %665 = dma.smem_to_hbm [#allocation5], 16, %s663, [#allocation3]
    $region53: #{forward.21} parent=1 // pred_fallthru
      _
    // Predicated region
    $region54: #{forward.21} parent=1 // pred_check
      _
    $region55: #{forward.21} parent=1 // pred_check_branch
      %667 = sbr.rel (0) target = $region57
    $region56: #{forward.21} parent=1 // pred_region
      %669 = vsyncadd [#allocation7], 0
      %s671 = sshll.u32 %s12, 4
      %s672 = int_to_ptr.hbm [resolvable:$true] %s671
      %674 = dma.smem_to_hbm [#allocation6], 16, %s672, [#allocation7]
    $region57: #{forward.21} parent=1 // pred_fallthru
      _
    // Predicated region
    $region58: #{forward.21} parent=1 // pred_check
      _
    $region59: #{forward.21} parent=1 // pred_check_branch
      %676 = sbr.rel (0) target = $region61
    $region60: #{forward.21} parent=1 // pred_region
      %678 = dma.done [#allocation3], 16
    $region61: #{forward.21} parent=1 // pred_fallthru
      _
    // Predicated region
    $region62: #{forward.21} parent=1 // pred_check
      _
    $region63: #{forward.21} parent=1 // pred_check_branch
      %680 = sbr.rel (0) target = $region65
    $region64: #{forward.21} parent=1 // pred_region
      %682 = dma.done [#allocation7], 16
    $region65: #{forward.21} parent=1 // pred_fallthru
      _
    %683 = sfence
    %684 = vsyncpa [#allocation3], 1
    %685 = vsyncpa [#allocation7], 1
    %686 = vsyncpa [#allocation4], 1

</llo_original>
